<compile_context>
chip_gen: v5e
topology: v5e:2x2
jax: 0.10.0
libtpu: 0.0.40
codegen_flags: <defaults>
</compile_context>

<pallas_src>
import jax
import jax.numpy as jnp
from jax.experimental import pallas as pl
from jax.experimental.pallas import tpu as pltpu


def _round_up(x, m):
    return ((x + m - 1) // m) * m


# ---------------------------------------------------------------------------
# Generic tiled matmul + bias kernel (bf16 MXU, f32 accumulate)
# Used for the hoisted input projection and for the FC head.
# ---------------------------------------------------------------------------
def _matmul_bias_kernel(x_ref, w_ref, b_ref, o_ref):
    o_ref[...] = (
        jnp.dot(x_ref[...].astype(jnp.bfloat16), w_ref[...],
                preferred_element_type=jnp.float32)
        + b_ref[...]
    )


def _matmul_bias(x2d, w_bf16, b_row):
    """x2d: (N, K) f32, w_bf16: (K, M) bf16, b_row: (1, M) f32 -> (N, M) f32."""
    N, K = x2d.shape
    M = w_bf16.shape[1]
    # Pick the biggest row tile that divides N (N is always a multiple of 8 here).
    row_tile = N
    for t in (512, 256, 128, 64, 32, 16, 8):
        if N % t == 0:
            row_tile = t
            break
    return pl.pallas_call(
        _matmul_bias_kernel,
        out_shape=jax.ShapeDtypeStruct((N, M), jnp.float32),
        grid=(N // row_tile,),
        in_specs=[
            pl.BlockSpec((row_tile, K), lambda i: (i, 0)),
            pl.BlockSpec((K, M), lambda i: (0, 0)),
            pl.BlockSpec((1, M), lambda i: (0, 0)),
        ],
        out_specs=pl.BlockSpec((row_tile, M), lambda i: (i, 0)),
        compiler_params=pltpu.CompilerParams(
            dimension_semantics=("parallel",)),
    )(x2d, w_bf16, b_row)


# ---------------------------------------------------------------------------
# Fused bidirectional LSTM recurrence.
#   grid = (2, T): outer axis = direction ("parallel" -> 2 TCs on v7x),
#                  inner axis = time ("arbitrary", sequential recurrence).
#   Per step only the recurrent dot (Bp,Hp)@(Hp,4Hp) runs; the input projection
#   (gin) was precomputed outside the loop.
# ---------------------------------------------------------------------------
def _make_bilstm_kernel(T, Hp):
    def kernel(lens_ref, gin_ref, whh_ref, out_ref, h_sc, c_sc):
        d = pl.program_id(0)   # direction: 0 = fwd, 1 = bwd
        t = pl.program_id(1)   # grid time step

        @pl.when(t == 0)
        def _():
            h_sc[...] = jnp.zeros_like(h_sc)
            c_sc[...] = jnp.zeros_like(c_sc)

        # Actual time index touched this step (reverse direction walks T-1 .. 0).
        t_actual = d * (T - 1) + (1 - 2 * d) * t

        h = h_sc[...]            # (Bp, Hp) f32
        c = c_sc[...]            # (Bp, Hp) f32

        # gates = (X @ W_ih^T + b)  [precomputed, gin]  +  h @ W_hh^T
        gates = gin_ref[...] + jnp.dot(
            h.astype(jnp.bfloat16), whh_ref[...],
            preferred_element_type=jnp.float32)          # (Bp, 4*Hp) f32

        # PyTorch gate order i, f, g, o — each a lane-aligned Hp-wide slab.
        i_g = jax.nn.sigmoid(gates[:, 0 * Hp:1 * Hp])
        f_g = jax.nn.sigmoid(gates[:, 1 * Hp:2 * Hp])
        g_g = jnp.tanh(gates[:, 2 * Hp:3 * Hp])
        o_g = jax.nn.sigmoid(gates[:, 3 * Hp:4 * Hp])

        c_new = f_g * c + i_g * g_g
        h_new = o_g * jnp.tanh(c_new)

        # packed-sequence masking: update state only while t_actual < length,
        # zero the output past the length (pad_packed_sequence semantics).
        mask = lens_ref[...] > t_actual                  # (Bp, 1) bool
        h_sc[...] = jnp.where(mask, h_new, h)
        c_sc[...] = jnp.where(mask, c_new, c)
        out_ref[...] = jnp.where(mask, h_new, 0.0)

    return kernel


def _bilstm_layer(gin, whh, lens_col, *, T, Bp, Hp):
    """gin: (T, Bp, 8*Hp) f32 (fwd gates | bwd gates along lanes),
       whh: (2, Hp, 4*Hp) bf16, lens_col: (Bp, 1) int32.
       Returns (T, Bp, 2*Hp) f32: fwd hidden in lanes [0,Hp), bwd in [Hp,2Hp)."""
    kernel = _make_bilstm_kernel(T, Hp)

    def t_of(d, t):          # element/time index for this (direction, step)
        return d * (T - 1) + (1 - 2 * d) * t

    return pl.pallas_call(
        kernel,
        out_shape=jax.ShapeDtypeStruct((T, Bp, 2 * Hp), jnp.float32),
        grid=(2, T),
        in_specs=[
            pl.BlockSpec((Bp, 1), lambda d, t: (0, 0)),                      # lengths
            pl.BlockSpec((None, Bp, 4 * Hp), lambda d, t: (t_of(d, t), 0, d)),  # gin
            pl.BlockSpec((None, Hp, 4 * Hp), lambda d, t: (d, 0, 0)),        # W_hh^T
        ],
        # Both directions write directly into the 2*Hp-wide output (no concat),
        # lane-dense (Hp is a multiple of 128) full-vreg stores.
        out_specs=pl.BlockSpec((None, Bp, Hp), lambda d, t: (t_of(d, t), 0, d)),
        scratch_shapes=[
            pltpu.VMEM((Bp, Hp), jnp.float32),    # h state
            pltpu.VMEM((Bp, Hp), jnp.float32),    # c state
        ],
        compiler_params=pltpu.CompilerParams(
            dimension_semantics=("parallel", "arbitrary")),
    )(lens_col, gin, whh)


# ---------------------------------------------------------------------------
# Full model forward (matches PyTorch LSTM.forward)
# ---------------------------------------------------------------------------
def lstm_forward(x_btd, lengths, params, *, max_len=None):
    """x_btd: (B, T, D) f32, lengths: (B,) int32.
       max_len: static output length (== max(lengths), pad_packed_sequence).
       Returns (B, max_len, output_size) f32."""
    H, Hp, O, Op = params["H"], params["Hp"], params["O"], params["Op"]
    B, T, D = x_btd.shape
    Bp = _round_up(B, 8)                          # sublane-full batch

    # Single host transpose into time-major; layers stay time-major throughout.
    x_tm = jnp.transpose(x_btd, (1, 0, 2))        # (T, B, D)
    if Bp != B:
        x_tm = jnp.pad(x_tm, ((0, 0), (0, Bp - B), (0, 0)))

    lens = jnp.asarray(lengths, jnp.int32).reshape(B)
    lens_col = jnp.zeros((Bp, 1), jnp.int32).at[:B, 0].set(lens)

    inp_flat = x_tm.reshape(T * Bp, D)            # time-major rows
    for lp in params["layers"]:
        # Hoisted input projection for BOTH directions in one big matmul:
        # (T*Bp, in) @ (in, 8*Hp) -> fwd gates | bwd gates.
        gin = _matmul_bias(inp_flat, lp["wih_t"], lp["bias"])
        gin = gin.reshape(T, Bp, 8 * Hp)
        out_l = _bilstm_layer(gin, lp["whh"], lens_col, T=T, Bp=Bp, Hp=Hp)
        inp_flat = out_l.reshape(T * Bp, 2 * Hp)

    # FC head (lane-dense: output padded to Op = multiple of 128).
    y = _matmul_bias(inp_flat, params["fc"]["w_t"], params["fc"]["b"])
    y = jnp.transpose(y.reshape(T, Bp, Op), (1, 0, 2))    # (Bp, T, Op)

    t_out = T if max_len is None else max_len
    return y[:B, :t_out, :O]


# ---------------------------------------------------------------------------
# Parameters: raw nn.LSTM / nn.Linear layout, then packed into padded
# lane-aligned bf16 kernel layouts.
# ---------------------------------------------------------------------------
def init_params(key, input_size, hidden_size, num_layers, output_size):
    raw = {"layers": []}
    bound = 1.0 / float(hidden_size) ** 0.5
    for l in range(num_layers):
        in_sz = input_size if l == 0 else 2 * hidden_size
        layer = {}
        for d in ("fwd", "bwd"):
            key, k1, k2, k3, k4 = jax.random.split(key, 5)
            layer[d] = dict(
                w_ih=jax.random.uniform(k1, (4 * hidden_size, in_sz),
                                        jnp.float32, -bound, bound),
                w_hh=jax.random.uniform(k2, (4 * hidden_size, hidden_size),
                                        jnp.float32, -bound, bound),
                b_ih=jax.random.uniform(k3, (4 * hidden_size,), jnp.float32,
                                        -bound, bound),
                b_hh=jax.random.uniform(k4, (4 * hidden_size,), jnp.float32,
                                        -bound, bound),
            )
        raw["layers"].append(layer)
    key, k1, k2 = jax.random.split(key, 3)
    bf = 1.0 / float(2 * hidden_size) ** 0.5
    raw["fc"] = dict(
        w=jax.random.uniform(k1, (output_size, 2 * hidden_size),
                             jnp.float32, -bf, bf),
        b=jax.random.uniform(k2, (output_size,), jnp.float32, -bf, bf))
    return raw


def pack_params(raw, input_size, hidden_size, num_layers, output_size):
    H = hidden_size
    Hp = _round_up(H, 128)        # lane-aligned hidden size
    Op = _round_up(output_size, 128)
    packed = {"layers": [], "H": H, "Hp": Hp, "O": output_size, "Op": Op}

    def pack_wih(w_ih, in_segments, in_p):
        # (4H, in_real) PyTorch layout -> (in_p, 4*Hp) gate-blocked, lane-padded.
        out = jnp.zeros((in_p, 4 * Hp), jnp.float32)
        for g in range(4):
            wg = w_ih[g * H:(g + 1) * H, :]                    # (H, in_real)
            for dst, src, n in in_segments:
                out = out.at[dst:dst + n, g * Hp:g * Hp + H].set(
                    wg[:, src:src + n].T)
        return out

    def pack_whh(w_hh):
        out = jnp.zeros((Hp, 4 * Hp), jnp.float32)
        for g in range(4):
            out = out.at[:H, g * Hp:g * Hp + H].set(w_hh[g * H:(g + 1) * H, :].T)
        return out

    def pack_bias(b_ih, b_hh):
        out = jnp.zeros((1, 4 * Hp), jnp.float32)
        s = b_ih + b_hh
        for g in range(4):
            out = out.at[0, g * Hp:g * Hp + H].set(s[g * H:(g + 1) * H])
        return out

    for l, layer in enumerate(raw["layers"]):
        if l == 0:
            segs, in_p = [(0, 0, input_size)], input_size
        else:
            # layer input is (fwd | bwd) hidden at lane offsets 0 and Hp
            segs, in_p = [(0, 0, H), (Hp, H, H)], 2 * Hp
        wih_both = jnp.concatenate(
            [pack_wih(layer[d]["w_ih"], segs, in_p) for d in ("fwd", "bwd")],
            axis=1)                                            # (in_p, 8*Hp)
        bias_both = jnp.concatenate(
            [pack_bias(layer[d]["b_ih"], layer[d]["b_hh"])
             for d in ("fwd", "bwd")], axis=1)                 # (1, 8*Hp)
        whh_stack = jnp.stack(
            [pack_whh(layer[d]["w_hh"]) for d in ("fwd", "bwd")], axis=0)
        packed["layers"].append(dict(
            wih_t=wih_both.astype(jnp.bfloat16),
            bias=bias_both,                                    # f32 (added post-matmul)
            whh=whh_stack.astype(jnp.bfloat16)))               # (2, Hp, 4*Hp)

    w = raw["fc"]["w"]                                         # (O, 2H)
    fc_w = jnp.zeros((2 * Hp, Op), jnp.float32)
    fc_w = fc_w.at[0:H, 0:output_size].set(w[:, 0:H].T)
    fc_w = fc_w.at[Hp:Hp + H, 0:output_size].set(w[:, H:2 * H].T)
    fc_b = jnp.zeros((1, Op), jnp.float32).at[0, :output_size].set(raw["fc"]["b"])
    packed["fc"] = dict(w_t=fc_w.astype(jnp.bfloat16), b=fc_b)
    return packed


if __name__ == "__main__":
    B, T, D, H, L, O = 2, 8, 16, 32, 2, 8

    key = jax.random.PRNGKey(0)
    key, kx = jax.random.split(key)
    x = jax.random.normal(kx, (B, T, D), jnp.float32)
    lengths = jnp.array([7, 5], dtype=jnp.int32)

    raw = init_params(key, D, H, L, O)
    params = pack_params(raw, D, H, L, O)

    # pad_packed_sequence output length = max(lengths); passed statically so the
    # traced forward never concretizes a traced value (jit-safe).
    max_len = int(jax.device_get(jnp.max(lengths)))

    out = lstm_forward(x, lengths, params, max_len=max_len)
    out = jax.block_until_ready(out)
    assert out.shape == (B, max_len, O), out.shape
    print("KERNEL_OK")
</pallas_src>

<mosaic_0001>
module attributes {stable_mosaic.version = 11 : i64} {
  func.func @_matmul_bias_kernel(%arg0: i32, %arg1: memref<64x16xf32, #tpu.memory_space<vmem>>, %arg2: memref<16x1024xbf16, #tpu.memory_space<vmem>>, %arg3: memref<1x1024xf32, #tpu.memory_space<vmem>>, %arg4: memref<64x1024xf32, #tpu.memory_space<vmem>>) attributes {dimension_semantics = [#tpu.dimension_semantics<parallel>], iteration_bounds = array<i64: 1>, scalar_prefetch = 0 : i64, scratch_operands = 0 : i64, tpu.core_type = #tpu.core_type<tc>, window_params = [{transform_indices = @transform_0, window_bounds = array<i64: 64, 16>}, {pipeline_mode = #tpu.pipeline_mode<synchronous>, transform_indices = @transform_1, window_bounds = array<i64: 16, 1024>}, {pipeline_mode = #tpu.pipeline_mode<synchronous>, transform_indices = @transform_2, window_bounds = array<i64: 1, 1024>}, {transform_indices = @transform_3, window_bounds = array<i64: 64, 1024>}]} {
    %c0 = arith.constant 0 : index
    %c0_0 = arith.constant 0 : index
    %0 = vector.load %arg1[%c0, %c0_0] : memref<64x16xf32, #tpu.memory_space<vmem>>, vector<64x16xf32>
    %1 = arith.truncf %0 : vector<64x16xf32> to vector<64x16xbf16>
    %c0_1 = arith.constant 0 : index
    %c0_2 = arith.constant 0 : index
    %2 = vector.load %arg2[%c0_1, %c0_2] : memref<16x1024xbf16, #tpu.memory_space<vmem>>, vector<16x1024xbf16>
    %cst = arith.constant dense<0.000000e+00> : vector<64x1024xf32>
    %3 = tpu.matmul %1, %2, %cst {dimension_numbers = #tpu.dot_dimension_numbers<[1], [0], [0], [1], [0, 0, 1, 1], [], []>} : vector<64x16xbf16>, vector<16x1024xbf16>, vector<64x1024xf32> -> vector<64x1024xf32>
    %c0_3 = arith.constant 0 : index
    %c0_4 = arith.constant 0 : index
    %4 = vector.load %arg3[%c0_3, %c0_4] : memref<1x1024xf32, #tpu.memory_space<vmem>>, vector<1x1024xf32>
    %5 = vector.broadcast %4 : vector<1x1024xf32> to vector<64x1024xf32>
    %6 = arith.addf %3, %5 : vector<64x1024xf32>
    %c0_5 = arith.constant 0 : index
    %c0_6 = arith.constant 0 : index
    %7 = vector.load %arg4[%c0_5, %c0_6] : memref<64x1024xf32, #tpu.memory_space<vmem>>, vector<64x1024xf32>
    tpu.vector_store %arg4[%c0_5, %c0_6], %6 {strides = array<i32>} : memref<64x1024xf32, #tpu.memory_space<vmem>>, vector<64x1024xf32>,
    return
  }
  func.func @transform_0(%arg0: i32) -> (i32, i32) {
    %c0_i32 = arith.constant 0 : i32
    %c0_i32_0 = arith.constant 0 : i32
    return %arg0, %c0_i32 : i32, i32
  }
  func.func @transform_1(%arg0: i32) -> (i32, i32) {
    %c0_i32 = arith.constant 0 : i32
    %c0_i32_0 = arith.constant 0 : i32
    %c0_i32_1 = arith.constant 0 : i32
    return %c0_i32, %c0_i32_0 : i32, i32
  }
  func.func @transform_2(%arg0: i32) -> (i32, i32) {
    %c0_i32 = arith.constant 0 : i32
    %c0_i32_0 = arith.constant 0 : i32
    %c0_i32_1 = arith.constant 0 : i32
    return %c0_i32, %c0_i32_0 : i32, i32
  }
  func.func @transform_3(%arg0: i32) -> (i32, i32) {
    %c0_i32 = arith.constant 0 : i32
    %c0_i32_0 = arith.constant 0 : i32
    return %arg0, %c0_i32 : i32, i32
  }
}

</mosaic_0001>

<llo_original>
// kernel: tpu_custom_call.1
$region0: #{tpu_custom_call.1}
  #allocation0 [shape = 'u32[]', space=smem, size = 0x4, offset = 0x4, fixed_abs, tag = 'smem constant byte address 0x4 - core index']
  #allocation1 [shape = 'u32[72,128]{1,0:T(1,128)}', space=vmem, size = 0x9000, scoped, tag = 'internal scratch']
  %s0 = inlined_call_operand.vmem [shape: f32[64,16], index: 0, kind: input, shape index: {}]
  %s1 = inlined_call_operand.vmem [shape: bf16[16,1024], index: 1, kind: input, shape index: {}]
  %s2 = inlined_call_operand.vmem [shape: f32[1,1024], index: 2, kind: input, shape index: {}]
  %s3 = inlined_call_operand.hbm [shape: f32[64,1024], index: 3, kind: output, shape index: {}]
  %s4 = sld [smem:[#allocation0]]
  $region22: #{tpu_custom_call.1} parent=0
    _
  %s6 = ssub.s32 1, %s4
  %s7 = scalar_select 0, %s6, %s4
  $region1: #{tpu_custom_call.1} parent=0
    #allocation2 [shape = 'u8[262144]{0}', space=vmem, size = 0x40000, scoped, tag = 'output window, operand 0, single buffered']
    #allocation3 [shape = 's32[1]{0}', space=sflag, size = 0x4, scoped, tag = 'scoped memory for tpu_custom_call.1']
    %8 = vsyncpa [#allocation3], 0
    // Predicated region
    $region2: #{tpu_custom_call.1} parent=1 // pred_check
      _
    $region3: #{tpu_custom_call.1} parent=1 // pred_check_branch
      %10 = sbr.rel (0) target = $region5
    $region4: #{tpu_custom_call.1} parent=1 // pred_region
      _
    $region5: #{tpu_custom_call.1} parent=1 // pred_fallthru
      _
    // Predicated region
    $region6: #{tpu_custom_call.1} parent=1 // pred_check
      _
    $region7: #{tpu_custom_call.1} parent=1 // pred_check_branch
      %12 = sbr.rel (0) target = $region9
    $region8: #{tpu_custom_call.1} parent=1 // pred_region
      _
    $region9: #{tpu_custom_call.1} parent=1 // pred_fallthru
      _
    // Predicated region
    $region10: #{tpu_custom_call.1} parent=1 // pred_check
      _
    $region11: #{tpu_custom_call.1} parent=1 // pred_check_branch
      %14 = sbr.rel (0) target = $region13
    $region12: #{tpu_custom_call.1} parent=1 // pred_region
      _
    $region13: #{tpu_custom_call.1} parent=1 // pred_fallthru
      _
    %v16 = vld [vmem:[%s0] sm:$0xff]
    %v17 = vld [vmem:[%s0 + $0x8] sm:$0xff]
    %v18 = vld [vmem:[%s0 + $0x10] sm:$0xff]
    %v19 = vld [vmem:[%s0 + $0x18] sm:$0xff]
    %v20 = vld [vmem:[%s0 + $0x20] sm:$0xff]
    %v21 = vld [vmem:[%s0 + $0x28] sm:$0xff]
    %v22 = vld [vmem:[%s0 + $0x30] sm:$0xff]
    %v23 = vld [vmem:[%s0 + $0x38] sm:$0xff]
    %v24 = vpack.c.bf16 %v17, %v16
    %v25 = vpack.c.bf16 %v19, %v18
    %v26 = vpack.c.bf16 %v21, %v20
    %v27 = vpack.c.bf16 %v23, %v22
    %v28 = vld [vmem:[%s1] sm:$0xff]
    %v29 = vld [vmem:[%s1 + $0x8] sm:$0xff]
    %v30 = vld [vmem:[%s1 + $0x10] sm:$0xff]
    %v31 = vld [vmem:[%s1 + $0x18] sm:$0xff]
    %v32 = vld [vmem:[%s1 + $0x20] sm:$0xff]
    %v33 = vld [vmem:[%s1 + $0x28] sm:$0xff]
    %v34 = vld [vmem:[%s1 + $0x30] sm:$0xff]
    %v35 = vld [vmem:[%s1 + $0x38] sm:$0xff]
    %v36 = vld [vmem:[%s2] sm:$0xff]
    %v38 = vperm.slane %v36, 0
    %v39 = vperm.slane %v36, 1
    %v40 = vperm.slane %v36, 2
    %v41 = vperm.slane %v36, 3
    %v42 = vperm.slane %v36, 4
    %v43 = vperm.slane %v36, 5
    %v44 = vperm.slane %v36, 6
    %v45 = vperm.slane %v36, 7
    %v62 = vunpack.c.l.b16 %v28
    %v63 = vunpack.c.h.b16 %v28
    %v64 = vunpack.c.l.b16 %v29
    %v65 = vunpack.c.h.b16 %v29
    %v66 = vunpack.c.l.b16 %v30
    %v67 = vunpack.c.h.b16 %v30
    %v68 = vunpack.c.l.b16 %v31
    %v69 = vunpack.c.h.b16 %v31
    %v70 = vunpack.c.l.b16 %v32
    %v71 = vunpack.c.h.b16 %v32
    %v72 = vunpack.c.l.b16 %v33
    %v73 = vunpack.c.h.b16 %v33
    %v74 = vunpack.c.l.b16 %v34
    %v75 = vunpack.c.h.b16 %v34
    %v76 = vunpack.c.l.b16 %v35
    %v77 = vunpack.c.h.b16 %v35
    %v78 = vpack.c.b16 %v70, %v62
    %v79 = vpack.c.b16 %v71, %v63
    %v80 = vpack.c.b16 %v72, %v64
    %v81 = vpack.c.b16 %v73, %v65
    %v82 = vpack.c.b16 %v74, %v66
    %v83 = vpack.c.b16 %v75, %v67
    %v84 = vpack.c.b16 %v76, %v68
    %v85 = vpack.c.b16 %v77, %v69
    %vm94 = vcmask 130048
    %v96 = vsel %vm94, %v24, 0
    %v99 = vsel %vm94, %v25, 0
    %v102 = vsel %vm94, %v26, 0
    %v105 = vsel %vm94, %v27, 0
    %107 = vmatpush.bf16.msra.mxu0 0
    %108 = vmatpush.bf16.msra.mxu0 0
    %109 = vmatpush.bf16.msra.mxu0 0
    %110 = vmatpush.bf16.msra.mxu0 0
    %111 = vmatpush.bf16.msra.mxu0 0
    %112 = vmatpush.bf16.msra.mxu0 0
    %113 = vmatpush.bf16.msra.mxu0 0
    %114 = vmatpush.bf16.msra.mxu0 %v78
    %115 = vmatmul.bf16.gmra.mxu0 %v96
    %v116 = vpop.f32.mrf.mxu0
    %v117 = vadd.f32 %v38, %v116
    %v118 = vpop.f32.mrf.mxu0
    %v119 = vadd.f32 %v38, %v118
    %120 = vmatmul.bf16.gmra.mxu0 %v99
    %v121 = vpop.f32.mrf.mxu0
    %v122 = vadd.f32 %v38, %v121
    %v123 = vpop.f32.mrf.mxu0
    %v124 = vadd.f32 %v38, %v123
    %125 = vmatmul.bf16.gmra.mxu0 %v102
    %v126 = vpop.f32.mrf.mxu0
    %v127 = vadd.f32 %v38, %v126
    %v128 = vpop.f32.mrf.mxu0
    %v129 = vadd.f32 %v38, %v128
    %130 = vmatmul.bf16.gmra.mxu0 %v105
    %v131 = vpop.f32.mrf.mxu0
    %v132 = vadd.f32 %v38, %v131
    %v133 = vpop.f32.mrf.mxu0
    %v134 = vadd.f32 %v38, %v133
    %135 = vdwg.mxu0
    %136 = vmatpush.bf16.msra.mxu0 0
    %137 = vmatpush.bf16.msra.mxu0 0
    %138 = vmatpush.bf16.msra.mxu0 0
    %139 = vmatpush.bf16.msra.mxu0 0
    %140 = vmatpush.bf16.msra.mxu0 0
    %141 = vmatpush.bf16.msra.mxu0 0
    %142 = vmatpush.bf16.msra.mxu0 0
    %143 = vmatpush.bf16.msra.mxu0 %v79
    %144 = vmatmul.bf16.gmra.mxu0 %v96
    %v145 = vpop.f32.mrf.mxu0
    %v146 = vadd.f32 %v39, %v145
    %v147 = vpop.f32.mrf.mxu0
    %v148 = vadd.f32 %v39, %v147
    %149 = vmatmul.bf16.gmra.mxu0 %v99
    %v150 = vpop.f32.mrf.mxu0
    %v151 = vadd.f32 %v39, %v150
    %v152 = vpop.f32.mrf.mxu0
    %v153 = vadd.f32 %v39, %v152
    %154 = vmatmul.bf16.gmra.mxu0 %v102
    %v155 = vpop.f32.mrf.mxu0
    %v156 = vadd.f32 %v39, %v155
    %v157 = vpop.f32.mrf.mxu0
    %v158 = vadd.f32 %v39, %v157
    %159 = vmatmul.bf16.gmra.mxu0 %v105
    %v160 = vpop.f32.mrf.mxu0
    %v161 = vadd.f32 %v39, %v160
    %v162 = vpop.f32.mrf.mxu0
    %v163 = vadd.f32 %v39, %v162
    %164 = vdwg.mxu0
    %165 = vmatpush.bf16.msra.mxu0 0
    %166 = vmatpush.bf16.msra.mxu0 0
    %167 = vmatpush.bf16.msra.mxu0 0
    %168 = vmatpush.bf16.msra.mxu0 0
    %169 = vmatpush.bf16.msra.mxu0 0
    %170 = vmatpush.bf16.msra.mxu0 0
    %171 = vmatpush.bf16.msra.mxu0 0
    %172 = vmatpush.bf16.msra.mxu0 %v80
    %173 = vmatmul.bf16.gmra.mxu0 %v96
    %v174 = vpop.f32.mrf.mxu0
    %v175 = vadd.f32 %v40, %v174
    %v176 = vpop.f32.mrf.mxu0
    %v177 = vadd.f32 %v40, %v176
    %178 = vmatmul.bf16.gmra.mxu0 %v99
    %v179 = vpop.f32.mrf.mxu0
    %v180 = vadd.f32 %v40, %v179
    %v181 = vpop.f32.mrf.mxu0
    %v182 = vadd.f32 %v40, %v181
    %183 = vmatmul.bf16.gmra.mxu0 %v102
    %v184 = vpop.f32.mrf.mxu0
    %v185 = vadd.f32 %v40, %v184
    %v186 = vpop.f32.mrf.mxu0
    %v187 = vadd.f32 %v40, %v186
    %188 = vmatmul.bf16.gmra.mxu0 %v105
    %v189 = vpop.f32.mrf.mxu0
    %v190 = vadd.f32 %v40, %v189
    %v191 = vpop.f32.mrf.mxu0
    %v192 = vadd.f32 %v40, %v191
    %193 = vdwg.mxu0
    %194 = vmatpush.bf16.msra.mxu0 0
    %195 = vmatpush.bf16.msra.mxu0 0
    %196 = vmatpush.bf16.msra.mxu0 0
    %197 = vmatpush.bf16.msra.mxu0 0
    %198 = vmatpush.bf16.msra.mxu0 0
    %199 = vmatpush.bf16.msra.mxu0 0
    %200 = vmatpush.bf16.msra.mxu0 0
    %201 = vmatpush.bf16.msra.mxu0 %v81
    %202 = vmatmul.bf16.gmra.mxu0 %v96
    %v203 = vpop.f32.mrf.mxu0
    %v204 = vadd.f32 %v41, %v203
    %v205 = vpop.f32.mrf.mxu0
    %v206 = vadd.f32 %v41, %v205
    %207 = vmatmul.bf16.gmra.mxu0 %v99
    %v208 = vpop.f32.mrf.mxu0
    %v209 = vadd.f32 %v41, %v208
    %v210 = vpop.f32.mrf.mxu0
    %v211 = vadd.f32 %v41, %v210
    %212 = vmatmul.bf16.gmra.mxu0 %v102
    %v213 = vpop.f32.mrf.mxu0
    %v214 = vadd.f32 %v41, %v213
    %v215 = vpop.f32.mrf.mxu0
    %v216 = vadd.f32 %v41, %v215
    %217 = vmatmul.bf16.gmra.mxu0 %v105
    %v218 = vpop.f32.mrf.mxu0
    %v219 = vadd.f32 %v41, %v218
    %v220 = vpop.f32.mrf.mxu0
    %v221 = vadd.f32 %v41, %v220
    %222 = vdwg.mxu0
    %223 = vmatpush.bf16.msra.mxu0 0
    %224 = vmatpush.bf16.msra.mxu0 0
    %225 = vmatpush.bf16.msra.mxu0 0
    %226 = vmatpush.bf16.msra.mxu0 0
    %227 = vmatpush.bf16.msra.mxu0 0
    %228 = vmatpush.bf16.msra.mxu0 0
    %229 = vmatpush.bf16.msra.mxu0 0
    %230 = vmatpush.bf16.msra.mxu0 %v82
    %231 = vmatmul.bf16.gmra.mxu0 %v96
    %v232 = vpop.f32.mrf.mxu0
    %v233 = vadd.f32 %v42, %v232
    %v234 = vpop.f32.mrf.mxu0
    %v235 = vadd.f32 %v42, %v234
    %236 = vmatmul.bf16.gmra.mxu0 %v99
    %v237 = vpop.f32.mrf.mxu0
    %v238 = vadd.f32 %v42, %v237
    %v239 = vpop.f32.mrf.mxu0
    %v240 = vadd.f32 %v42, %v239
    %241 = vmatmul.bf16.gmra.mxu0 %v102
    %v242 = vpop.f32.mrf.mxu0
    %v243 = vadd.f32 %v42, %v242
    %v244 = vpop.f32.mrf.mxu0
    %v245 = vadd.f32 %v42, %v244
    %246 = vmatmul.bf16.gmra.mxu0 %v105
    %v247 = vpop.f32.mrf.mxu0
    %v248 = vadd.f32 %v42, %v247
    %v249 = vpop.f32.mrf.mxu0
    %v250 = vadd.f32 %v42, %v249
    %251 = vdwg.mxu0
    %252 = vmatpush.bf16.msra.mxu0 0
    %253 = vmatpush.bf16.msra.mxu0 0
    %254 = vmatpush.bf16.msra.mxu0 0
    %255 = vmatpush.bf16.msra.mxu0 0
    %256 = vmatpush.bf16.msra.mxu0 0
    %257 = vmatpush.bf16.msra.mxu0 0
    %258 = vmatpush.bf16.msra.mxu0 0
    %259 = vmatpush.bf16.msra.mxu0 %v83
    %260 = vmatmul.bf16.gmra.mxu0 %v96
    %v261 = vpop.f32.mrf.mxu0
    %v262 = vadd.f32 %v43, %v261
    %v263 = vpop.f32.mrf.mxu0
    %v264 = vadd.f32 %v43, %v263
    %265 = vmatmul.bf16.gmra.mxu0 %v99
    %v266 = vpop.f32.mrf.mxu0
    %v267 = vadd.f32 %v43, %v266
    %v268 = vpop.f32.mrf.mxu0
    %v269 = vadd.f32 %v43, %v268
    %270 = vmatmul.bf16.gmra.mxu0 %v102
    %v271 = vpop.f32.mrf.mxu0
    %v272 = vadd.f32 %v43, %v271
    %v273 = vpop.f32.mrf.mxu0
    %v274 = vadd.f32 %v43, %v273
    %275 = vmatmul.bf16.gmra.mxu0 %v105
    %v276 = vpop.f32.mrf.mxu0
    %v277 = vadd.f32 %v43, %v276
    %v278 = vpop.f32.mrf.mxu0
    %v279 = vadd.f32 %v43, %v278
    %280 = vdwg.mxu0
    %281 = vmatpush.bf16.msra.mxu0 0
    %282 = vmatpush.bf16.msra.mxu0 0
    %283 = vmatpush.bf16.msra.mxu0 0
    %284 = vmatpush.bf16.msra.mxu0 0
    %285 = vmatpush.bf16.msra.mxu0 0
    %286 = vmatpush.bf16.msra.mxu0 0
    %287 = vmatpush.bf16.msra.mxu0 0
    %288 = vmatpush.bf16.msra.mxu0 %v84
    %289 = vmatmul.bf16.gmra.mxu0 %v96
    %v290 = vpop.f32.mrf.mxu0
    %v291 = vadd.f32 %v44, %v290
    %v292 = vpop.f32.mrf.mxu0
    %v293 = vadd.f32 %v44, %v292
    %294 = vmatmul.bf16.gmra.mxu0 %v99
    %v295 = vpop.f32.mrf.mxu0
    %v296 = vadd.f32 %v44, %v295
    %v297 = vpop.f32.mrf.mxu0
    %v298 = vadd.f32 %v44, %v297
    %299 = vmatmul.bf16.gmra.mxu0 %v102
    %v300 = vpop.f32.mrf.mxu0
    %v301 = vadd.f32 %v44, %v300
    %v302 = vpop.f32.mrf.mxu0
    %v303 = vadd.f32 %v44, %v302
    %304 = vmatmul.bf16.gmra.mxu0 %v105
    %v305 = vpop.f32.mrf.mxu0
    %v306 = vadd.f32 %v44, %v305
    %v307 = vpop.f32.mrf.mxu0
    %v308 = vadd.f32 %v44, %v307
    %309 = vdwg.mxu0
    %310 = vmatpush.bf16.msra.mxu0 0
    %311 = vmatpush.bf16.msra.mxu0 0
    %312 = vmatpush.bf16.msra.mxu0 0
    %313 = vmatpush.bf16.msra.mxu0 0
    %314 = vmatpush.bf16.msra.mxu0 0
    %315 = vmatpush.bf16.msra.mxu0 0
    %316 = vmatpush.bf16.msra.mxu0 0
    %317 = vmatpush.bf16.msra.mxu0 %v85
    %318 = vmatmul.bf16.gmra.mxu0 %v96
    %v319 = vpop.f32.mrf.mxu0
    %v320 = vadd.f32 %v45, %v319
    %v321 = vpop.f32.mrf.mxu0
    %v322 = vadd.f32 %v45, %v321
    %323 = vmatmul.bf16.gmra.mxu0 %v99
    %v324 = vpop.f32.mrf.mxu0
    %v325 = vadd.f32 %v45, %v324
    %v326 = vpop.f32.mrf.mxu0
    %v327 = vadd.f32 %v45, %v326
    %328 = vmatmul.bf16.gmra.mxu0 %v102
    %v329 = vpop.f32.mrf.mxu0
    %v330 = vadd.f32 %v45, %v329
    %v331 = vpop.f32.mrf.mxu0
    %v332 = vadd.f32 %v45, %v331
    %333 = vmatmul.bf16.gmra.mxu0 %v105
    %v334 = vpop.f32.mrf.mxu0
    %v335 = vadd.f32 %v45, %v334
    %v336 = vpop.f32.mrf.mxu0
    %v337 = vadd.f32 %v45, %v336
    %338 = vdwg.mxu0
    %339 = vst [vmem:[#allocation2] sm:$0xff] %v117
    %340 = vst [vmem:[#allocation2 + $0x8] sm:$0xff] %v146
    %341 = vst [vmem:[#allocation2 + $0x10] sm:$0xff] %v175
    %342 = vst [vmem:[#allocation2 + $0x18] sm:$0xff] %v204
    %343 = vst [vmem:[#allocation2 + $0x20] sm:$0xff] %v233
    %344 = vst [vmem:[#allocation2 + $0x28] sm:$0xff] %v262
    %345 = vst [vmem:[#allocation2 + $0x30] sm:$0xff] %v291
    %346 = vst [vmem:[#allocation2 + $0x38] sm:$0xff] %v320
    %347 = vst [vmem:[#allocation2 + $0x40] sm:$0xff] %v119
    %348 = vst [vmem:[#allocation2 + $0x48] sm:$0xff] %v148
    %349 = vst [vmem:[#allocation2 + $0x50] sm:$0xff] %v177
    %350 = vst [vmem:[#allocation2 + $0x58] sm:$0xff] %v206
    %351 = vst [vmem:[#allocation2 + $0x60] sm:$0xff] %v235
    %352 = vst [vmem:[#allocation2 + $0x68] sm:$0xff] %v264
    %353 = vst [vmem:[#allocation2 + $0x70] sm:$0xff] %v293
    %354 = vst [vmem:[#allocation2 + $0x78] sm:$0xff] %v322
    %355 = vst [vmem:[#allocation2 + $0x80] sm:$0xff] %v122
    %356 = vst [vmem:[#allocation2 + $0x88] sm:$0xff] %v151
    %357 = vst [vmem:[#allocation2 + $0x90] sm:$0xff] %v180
    %358 = vst [vmem:[#allocation2 + $0x98] sm:$0xff] %v209
    %359 = vst [vmem:[#allocation2 + $0xa0] sm:$0xff] %v238
    %360 = vst [vmem:[#allocation2 + $0xa8] sm:$0xff] %v267
    %361 = vst [vmem:[#allocation2 + $0xb0] sm:$0xff] %v296
    %362 = vst [vmem:[#allocation2 + $0xb8] sm:$0xff] %v325
    %363 = vst [vmem:[#allocation2 + $0xc0] sm:$0xff] %v124
    %364 = vst [vmem:[#allocation2 + $0xc8] sm:$0xff] %v153
    %365 = vst [vmem:[#allocation2 + $0xd0] sm:$0xff] %v182
    %366 = vst [vmem:[#allocation2 + $0xd8] sm:$0xff] %v211
    %367 = vst [vmem:[#allocation2 + $0xe0] sm:$0xff] %v240
    %368 = vst [vmem:[#allocation2 + $0xe8] sm:$0xff] %v269
    %369 = vst [vmem:[#allocation2 + $0xf0] sm:$0xff] %v298
    %370 = vst [vmem:[#allocation2 + $0xf8] sm:$0xff] %v327
    %371 = vst [vmem:[#allocation2 + $0x100] sm:$0xff] %v127
    %372 = vst [vmem:[#allocation2 + $0x108] sm:$0xff] %v156
    %373 = vst [vmem:[#allocation2 + $0x110] sm:$0xff] %v185
    %374 = vst [vmem:[#allocation2 + $0x118] sm:$0xff] %v214
    %375 = vst [vmem:[#allocation2 + $0x120] sm:$0xff] %v243
    %376 = vst [vmem:[#allocation2 + $0x128] sm:$0xff] %v272
    %377 = vst [vmem:[#allocation2 + $0x130] sm:$0xff] %v301
    %378 = vst [vmem:[#allocation2 + $0x138] sm:$0xff] %v330
    %379 = vst [vmem:[#allocation2 + $0x140] sm:$0xff] %v129
    %380 = vst [vmem:[#allocation2 + $0x148] sm:$0xff] %v158
    %381 = vst [vmem:[#allocation2 + $0x150] sm:$0xff] %v187
    %382 = vst [vmem:[#allocation2 + $0x158] sm:$0xff] %v216
    %383 = vst [vmem:[#allocation2 + $0x160] sm:$0xff] %v245
    %384 = vst [vmem:[#allocation2 + $0x168] sm:$0xff] %v274
    %385 = vst [vmem:[#allocation2 + $0x170] sm:$0xff] %v303
    %386 = vst [vmem:[#allocation2 + $0x178] sm:$0xff] %v332
    %387 = vst [vmem:[#allocation2 + $0x180] sm:$0xff] %v132
    %388 = vst [vmem:[#allocation2 + $0x188] sm:$0xff] %v161
    %389 = vst [vmem:[#allocation2 + $0x190] sm:$0xff] %v190
    %390 = vst [vmem:[#allocation2 + $0x198] sm:$0xff] %v219
    %391 = vst [vmem:[#allocation2 + $0x1a0] sm:$0xff] %v248
    %392 = vst [vmem:[#allocation2 + $0x1a8] sm:$0xff] %v277
    %393 = vst [vmem:[#allocation2 + $0x1b0] sm:$0xff] %v306
    %394 = vst [vmem:[#allocation2 + $0x1b8] sm:$0xff] %v335
    %395 = vst [vmem:[#allocation2 + $0x1c0] sm:$0xff] %v134
    %396 = vst [vmem:[#allocation2 + $0x1c8] sm:$0xff] %v163
    %397 = vst [vmem:[#allocation2 + $0x1d0] sm:$0xff] %v192
    %398 = vst [vmem:[#allocation2 + $0x1d8] sm:$0xff] %v221
    %399 = vst [vmem:[#allocation2 + $0x1e0] sm:$0xff] %v250
    %400 = vst [vmem:[#allocation2 + $0x1e8] sm:$0xff] %v279
    %401 = vst [vmem:[#allocation2 + $0x1f0] sm:$0xff] %v308
    %402 = vst [vmem:[#allocation2 + $0x1f8] sm:$0xff] %v337
    // Predicated region
    $region14: #{tpu_custom_call.1} parent=1 // pred_check
      _
    $region15: #{tpu_custom_call.1} parent=1 // pred_check_branch
      %404 = sbr.rel (0) target = $region17
    $region16: #{tpu_custom_call.1} parent=1 // pred_region
      %406 = vsyncadd [#allocation3], 0
      %s407 = sshll.u32 [#allocation2], 4
      %s408 = int_to_ptr.vmem [resolvable:$true] %s407
      %s409 = sshll.u32 %s3, 4
      %s410 = int_to_ptr.hbm [resolvable:$true] %s409
      %415 = dma.vmem_to_hbm [thread:$0]  %s408, 8192, %s410, [#allocation3], 1024, 1024, 64
    $region17: #{tpu_custom_call.1} parent=1 // pred_fallthru
      _
    // Predicated region
    $region18: #{tpu_custom_call.1} parent=1 // pred_check
      _
    $region19: #{tpu_custom_call.1} parent=1 // pred_check_branch
      %417 = sbr.rel (0) target = $region21
    $region20: #{tpu_custom_call.1} parent=1 // pred_region
      %419 = dma.done [#allocation3], 8192
    $region21: #{tpu_custom_call.1} parent=1 // pred_fallthru
      _
    %420 = vsyncpa [#allocation3], 1

</llo_original>
